<compile_context>
chip_gen: v7x
topology: tpu7x:2x2x1
jax: 0.10.0
libtpu: 0.0.40
codegen_flags: <defaults>
</compile_context>

<pallas_src>
import jax
import jax.numpy as jnp
from jax.experimental import pallas as pl
from jax.experimental.pallas import tpu as pltpu

OUT_PAD = 128       # lane-dense padded output width
TM_MAX = 2048       # batch tile cap; keeps VMEM use << 64 MiB (v7x) / 16 MiB scoped (v5e)


def qnetwork_kernel(x_ref, w1_ref, b1_ref, w2_ref, b2_ref, w3_ref, b3_ref, o_ref):
    # One (TM, 18) batch tile per grid step; all weights are VMEM-resident.
    x = x_ref[...]
    h1 = jnp.dot(x, w1_ref[...], preferred_element_type=jnp.float32) + b1_ref[...]
    h1 = jnp.maximum(h1, 0.0)
    h2 = jnp.dot(h1, w2_ref[...], preferred_element_type=jnp.float32) + b2_ref[...]
    h2 = jnp.maximum(h2, 0.0)
    out = jnp.dot(h2, w3_ref[...], preferred_element_type=jnp.float32) + b3_ref[...]
    o_ref[...] = out.astype(o_ref.dtype)


def qnetwork_forward(x, params, *, tm_max=TM_MAX):
    """x: any shape (B, ...) — flattened to (B, input_size) like nn.Flatten."""
    w1, b1, w2, b2, w3, b3 = params
    batch = x.shape[0]
    x2d = x.reshape(batch, -1).astype(jnp.float32)  # glue: Flatten
    in_size = w1.shape[0]
    assert x2d.shape[1] == in_size, "flattened feature dim mismatch"
    h1_size = w1.shape[1]
    h2_size = w2.shape[1]
    out_size = w3.shape[1]

    # Lane-dense output: zero-pad the last layer from out_size -> OUT_PAD columns.
    w3p = jnp.zeros((h2_size, OUT_PAD), jnp.float32).at[:, :out_size].set(w3)
    b3p = jnp.zeros((1, OUT_PAD), jnp.float32).at[:, :out_size].set(b3)

    # Batch tile: multiple of 8, capped; pad batch to a multiple of TM (unmasked stores).
    tm = min(tm_max, max(8, ((batch + 7) // 8) * 8))
    grid_b = pl.cdiv(batch, tm)
    b_pad = grid_b * tm
    if b_pad != batch:
        x2d = jnp.pad(x2d, ((0, b_pad - batch), (0, 0)))

    resident = lambda shape: pl.BlockSpec(shape, lambda i: (0, 0))

    out = pl.pallas_call(
        qnetwork_kernel,
        out_shape=jax.ShapeDtypeStruct((b_pad, OUT_PAD), jnp.float32),
        grid=(grid_b,),
        in_specs=[
            pl.BlockSpec((tm, in_size), lambda i: (i, 0)),   # x: streamed over batch
            resident((in_size, h1_size)),                    # w1
            resident((1, h1_size)),                          # b1
            resident((h1_size, h2_size)),                    # w2
            resident((1, h2_size)),                          # b2
            resident((h2_size, OUT_PAD)),                    # w3 (padded)
            resident((1, OUT_PAD)),                          # b3 (padded)
        ],
        out_specs=pl.BlockSpec((tm, OUT_PAD), lambda i: (i, 0)),
        compiler_params=pltpu.CompilerParams(
            dimension_semantics=("parallel",),               # v7x dual-TC sharding
        ),
    )(x2d, w1, b1, w2, b2, w3p, b3p)

    # Strip batch padding and the lane-padding columns.
    return out[:batch, :out_size]


def init_params(key, input_size=18, hidden_size1=128, hidden_size2=128, output_size=9):
    """Deterministic init mirroring nn.Linear's U(-1/sqrt(fan_in), 1/sqrt(fan_in))."""
    ks = jax.random.split(key, 6)

    def linear(kw, kb, fan_in, fan_out):
        bound = 1.0 / jnp.sqrt(fan_in)
        w = jax.random.uniform(kw, (fan_in, fan_out), jnp.float32, -bound, bound)
        b = jax.random.uniform(kb, (1, fan_out), jnp.float32, -bound, bound)
        return w, b

    w1, b1 = linear(ks[0], ks[1], input_size, hidden_size1)
    w2, b2 = linear(ks[2], ks[3], hidden_size1, hidden_size2)
    w3, b3 = linear(ks[4], ks[5], hidden_size2, output_size)
    return (w1, b1, w2, b2, w3, b3)


if __name__ == "__main__":
    key = jax.random.PRNGKey(0)
    k_params, k_x = jax.random.split(key)

    params = init_params(k_params)

    # Small example input: batch=4, shaped (4, 2, 9) so Flatten gives 18 features.
    x = jax.random.normal(k_x, (4, 2, 9), dtype=jnp.float32)

    out = qnetwork_forward(x, params)
    out = jax.block_until_ready(out)

    # Pure-JAX reference check of the same math.
    w1, b1, w2, b2, w3, b3 = params
    xf = x.reshape(x.shape[0], -1)
    ref = jnp.maximum(xf @ w1 + b1, 0.0)
    ref = jnp.maximum(ref @ w2 + b2, 0.0)
    ref = ref @ w3 + b3
    assert out.shape == (4, 9)
    assert jnp.allclose(out, ref, atol=1e-5, rtol=1e-5)

    # Also exercise a ragged, larger batch to verify the grid/padding path.
    x_big = jax.random.normal(jax.random.PRNGKey(1), (1000, 2, 9), dtype=jnp.float32)
    out_big = jax.block_until_ready(qnetwork_forward(x_big, params))
    xf_big = x_big.reshape(x_big.shape[0], -1)
    ref_big = jnp.maximum(xf_big @ w1 + b1, 0.0)
    ref_big = jnp.maximum(ref_big @ w2 + b2, 0.0)
    ref_big = ref_big @ w3 + b3
    assert out_big.shape == (1000, 9)
    assert jnp.allclose(out_big, ref_big, atol=1e-5, rtol=1e-5)

    print("KERNEL_OK")
</pallas_src>

<mosaic_0001>
module attributes {stable_mosaic.version = 11 : i64} {
  func.func @qnetwork_kernel(%arg0: i32, %arg1: memref<8x18xf32, #tpu.memory_space<vmem>>, %arg2: memref<18x128xf32, #tpu.memory_space<vmem>>, %arg3: memref<1x128xf32, #tpu.memory_space<vmem>>, %arg4: memref<128x128xf32, #tpu.memory_space<vmem>>, %arg5: memref<1x128xf32, #tpu.memory_space<vmem>>, %arg6: memref<128x128xf32, #tpu.memory_space<vmem>>, %arg7: memref<1x128xf32, #tpu.memory_space<vmem>>, %arg8: memref<8x128xf32, #tpu.memory_space<vmem>>) attributes {dimension_semantics = [#tpu.dimension_semantics<parallel>], iteration_bounds = array<i64: 1>, scalar_prefetch = 0 : i64, scratch_operands = 0 : i64, tpu.core_type = #tpu.core_type<tc>, window_params = [{transform_indices = @transform_0, window_bounds = array<i64: 8, 18>}, {pipeline_mode = #tpu.pipeline_mode<synchronous>, transform_indices = @transform_1, window_bounds = array<i64: 18, 128>}, {pipeline_mode = #tpu.pipeline_mode<synchronous>, transform_indices = @transform_2, window_bounds = array<i64: 1, 128>}, {pipeline_mode = #tpu.pipeline_mode<synchronous>, transform_indices = @transform_3, window_bounds = array<i64: 128, 128>}, {pipeline_mode = #tpu.pipeline_mode<synchronous>, transform_indices = @transform_4, window_bounds = array<i64: 1, 128>}, {pipeline_mode = #tpu.pipeline_mode<synchronous>, transform_indices = @transform_5, window_bounds = array<i64: 128, 128>}, {pipeline_mode = #tpu.pipeline_mode<synchronous>, transform_indices = @transform_6, window_bounds = array<i64: 1, 128>}, {transform_indices = @transform_7, window_bounds = array<i64: 8, 128>}]} {
    %c0 = arith.constant 0 : index
    %c0_0 = arith.constant 0 : index
    %0 = vector.load %arg1[%c0, %c0_0] : memref<8x18xf32, #tpu.memory_space<vmem>>, vector<8x18xf32>
    %c0_1 = arith.constant 0 : index
    %c0_2 = arith.constant 0 : index
    %1 = vector.load %arg2[%c0_1, %c0_2] : memref<18x128xf32, #tpu.memory_space<vmem>>, vector<18x128xf32>
    %cst = arith.constant dense<0.000000e+00> : vector<8x128xf32>
    %2 = tpu.matmul %0, %1, %cst {dimension_numbers = #tpu.dot_dimension_numbers<[1], [0], [0], [1], [0, 0, 1, 1], [], []>} : vector<8x18xf32>, vector<18x128xf32>, vector<8x128xf32> -> vector<8x128xf32>
    %c0_3 = arith.constant 0 : index
    %c0_4 = arith.constant 0 : index
    %3 = vector.load %arg3[%c0_3, %c0_4] : memref<1x128xf32, #tpu.memory_space<vmem>>, vector<1x128xf32>
    %4 = vector.broadcast %3 : vector<1x128xf32> to vector<8x128xf32>
    %5 = arith.addf %2, %4 : vector<8x128xf32>
    %cst_5 = arith.constant 0.000000e+00 : f32
    %6 = vector.broadcast %cst_5 : f32 to vector<8x128xf32>
    %7 = arith.maximumf %5, %6 : vector<8x128xf32>
    %c0_6 = arith.constant 0 : index
    %c0_7 = arith.constant 0 : index
    %8 = vector.load %arg4[%c0_6, %c0_7] : memref<128x128xf32, #tpu.memory_space<vmem>>, vector<128x128xf32>
    %cst_8 = arith.constant dense<0.000000e+00> : vector<8x128xf32>
    %9 = tpu.matmul %7, %8, %cst_8 {dimension_numbers = #tpu.dot_dimension_numbers<[1], [0], [0], [1], [0, 0, 1, 1], [], []>} : vector<8x128xf32>, vector<128x128xf32>, vector<8x128xf32> -> vector<8x128xf32>
    %c0_9 = arith.constant 0 : index
    %c0_10 = arith.constant 0 : index
    %10 = vector.load %arg5[%c0_9, %c0_10] : memref<1x128xf32, #tpu.memory_space<vmem>>, vector<1x128xf32>
    %11 = vector.broadcast %10 : vector<1x128xf32> to vector<8x128xf32>
    %12 = arith.addf %9, %11 : vector<8x128xf32>
    %cst_11 = arith.constant 0.000000e+00 : f32
    %13 = vector.broadcast %cst_11 : f32 to vector<8x128xf32>
    %14 = arith.maximumf %12, %13 : vector<8x128xf32>
    %c0_12 = arith.constant 0 : index
    %c0_13 = arith.constant 0 : index
    %15 = vector.load %arg6[%c0_12, %c0_13] : memref<128x128xf32, #tpu.memory_space<vmem>>, vector<128x128xf32>
    %cst_14 = arith.constant dense<0.000000e+00> : vector<8x128xf32>
    %16 = tpu.matmul %14, %15, %cst_14 {dimension_numbers = #tpu.dot_dimension_numbers<[1], [0], [0], [1], [0, 0, 1, 1], [], []>} : vector<8x128xf32>, vector<128x128xf32>, vector<8x128xf32> -> vector<8x128xf32>
    %c0_15 = arith.constant 0 : index
    %c0_16 = arith.constant 0 : index
    %17 = vector.load %arg7[%c0_15, %c0_16] : memref<1x128xf32, #tpu.memory_space<vmem>>, vector<1x128xf32>
    %18 = vector.broadcast %17 : vector<1x128xf32> to vector<8x128xf32>
    %19 = arith.addf %16, %18 : vector<8x128xf32>
    %c0_17 = arith.constant 0 : index
    %c0_18 = arith.constant 0 : index
    %20 = vector.load %arg8[%c0_17, %c0_18] : memref<8x128xf32, #tpu.memory_space<vmem>>, vector<8x128xf32>
    tpu.vector_store %arg8[%c0_17, %c0_18], %19 {strides = array<i32>} : memref<8x128xf32, #tpu.memory_space<vmem>>, vector<8x128xf32>,
    return
  }
  func.func @transform_0(%arg0: i32) -> (i32, i32) {
    %c0_i32 = arith.constant 0 : i32
    %c0_i32_0 = arith.constant 0 : i32
    return %arg0, %c0_i32 : i32, i32
  }
  func.func @transform_1(%arg0: i32) -> (i32, i32) {
    %c0_i32 = arith.constant 0 : i32
    %c0_i32_0 = arith.constant 0 : i32
    %c0_i32_1 = arith.constant 0 : i32
    return %c0_i32, %c0_i32_0 : i32, i32
  }
  func.func @transform_2(%arg0: i32) -> (i32, i32) {
    %c0_i32 = arith.constant 0 : i32
    %c0_i32_0 = arith.constant 0 : i32
    %c0_i32_1 = arith.constant 0 : i32
    return %c0_i32, %c0_i32_0 : i32, i32
  }
  func.func @transform_3(%arg0: i32) -> (i32, i32) {
    %c0_i32 = arith.constant 0 : i32
    %c0_i32_0 = arith.constant 0 : i32
    %c0_i32_1 = arith.constant 0 : i32
    return %c0_i32, %c0_i32_0 : i32, i32
  }
  func.func @transform_4(%arg0: i32) -> (i32, i32) {
    %c0_i32 = arith.constant 0 : i32
    %c0_i32_0 = arith.constant 0 : i32
    %c0_i32_1 = arith.constant 0 : i32
    return %c0_i32, %c0_i32_0 : i32, i32
  }
  func.func @transform_5(%arg0: i32) -> (i32, i32) {
    %c0_i32 = arith.constant 0 : i32
    %c0_i32_0 = arith.constant 0 : i32
    %c0_i32_1 = arith.constant 0 : i32
    return %c0_i32, %c0_i32_0 : i32, i32
  }
  func.func @transform_6(%arg0: i32) -> (i32, i32) {
    %c0_i32 = arith.constant 0 : i32
    %c0_i32_0 = arith.constant 0 : i32
    %c0_i32_1 = arith.constant 0 : i32
    return %c0_i32, %c0_i32_0 : i32, i32
  }
  func.func @transform_7(%arg0: i32) -> (i32, i32) {
    %c0_i32 = arith.constant 0 : i32
    %c0_i32_0 = arith.constant 0 : i32
    return %arg0, %c0_i32 : i32, i32
  }
}

</mosaic_0001>

<llo_original>
// kernel: tpu_custom_call.1
$region0: #{tpu_custom_call.1}
  #allocation0 [shape = 'u32[]', space=smem, size = 0x4, offset = 0x4, fixed_abs, tag = 'smem constant byte address 0x4 - core index']
  #allocation1 [shape = 'u32[144,128]{1,0:T(1,128)}', space=vmem, size = 0x12000, scoped, tag = 'internal scratch']
  %s0 = inlined_call_operand.hbm [shape: f32[8,18], index: 0, kind: input, shape index: {}]
  %s1 = inlined_call_operand.hbm [shape: f32[18,128], index: 1, kind: input, shape index: {}]
  %s2 = inlined_call_operand.vmem [shape: f32[1,128], index: 2, kind: input, shape index: {}]
  %s3 = inlined_call_operand.hbm [shape: f32[128,128], index: 3, kind: input, shape index: {}]
  %s4 = inlined_call_operand.vmem [shape: f32[1,128], index: 4, kind: input, shape index: {}]
  %s5 = inlined_call_operand.hbm [shape: f32[128,128], index: 5, kind: input, shape index: {}]
  %s6 = inlined_call_operand.vmem [shape: f32[1,128], index: 6, kind: input, shape index: {}]
  %s7 = inlined_call_operand.hbm [shape: f32[8,128], index: 7, kind: output, shape index: {}]
  %s8 = sld [smem:[#allocation0]]
  $region54: #{tpu_custom_call.1} parent=0
    _
  %s10 = ssub.s32 1, %s8
  %s11 = scalar_select 0, %s10, %s8
  $region1: #{tpu_custom_call.1} parent=0
    #allocation2 [shape = 'u8[4096]{0}', space=vmem, size = 0x1000, scoped, tag = 'input window, operand 0, single buffered']
    #allocation3 [shape = 's32[1]{0}', space=sflag, size = 0x4, scoped, tag = 'scoped memory for tpu_custom_call.1']
    #allocation4 [shape = 's32[1]{0}', space=sflag, size = 0x4, scoped, tag = 'scoped memory for tpu_custom_call.1']
    #allocation5 [shape = 'u8[12288]{0}', space=vmem, size = 0x3000, scoped, tag = 'input window, operand 1, single buffered']
    #allocation6 [shape = 's32[1]{0}', space=sflag, size = 0x4, scoped, tag = 'scoped memory for tpu_custom_call.1']
    #allocation7 [shape = 'u8[65536]{0}', space=vmem, size = 0x10000, scoped, tag = 'input window, operand 3, single buffered']
    #allocation8 [shape = 'u8[65536]{0}', space=vmem, size = 0x10000, scoped, tag = 'input window, operand 5, single buffered']
    #allocation9 [shape = 's32[1]{0}', space=sflag, size = 0x4, scoped, tag = 'scoped memory for tpu_custom_call.1']
    #allocation10 [shape = 'u8[4096]{0}', space=vmem, size = 0x1000, scoped, tag = 'output window, operand 0, single buffered']
    %12 = vsyncpa [#allocation3], 0
    %13 = vsyncpa [#allocation6], 0
    %14 = vsyncpa [#allocation9], 0
    %15 = vsyncpa [#allocation4], 0
    // Predicated region
    $region2: #{tpu_custom_call.1} parent=1 // pred_check
      _
    $region3: #{tpu_custom_call.1} parent=1 // pred_check_branch
      %17 = sbr.rel (0) target = $region5
    $region4: #{tpu_custom_call.1} parent=1 // pred_region
      %s19 = ssub.s32 128, 128
      %20 = vsyncadd [#allocation3], %s19
      %s22 = sshll.u32 [#allocation2], 4
      %s23 = int_to_ptr.vmem [resolvable:$true] %s22
      %25 = dma.hbm_to_vmem [thread:$0]  %s0, 128, %s23, [#allocation3]
    $region5: #{tpu_custom_call.1} parent=1 // pred_fallthru
      _
    // Predicated region
    $region6: #{tpu_custom_call.1} parent=1 // pred_check
      _
    $region7: #{tpu_custom_call.1} parent=1 // pred_check_branch
      %27 = sbr.rel (0) target = $region9
    $region8: #{tpu_custom_call.1} parent=1 // pred_region
      %s29 = ssub.s32 384, 384
      %30 = vsyncadd [#allocation6], %s29
      %s31 = sshll.u32 [#allocation5], 4
      %s32 = int_to_ptr.vmem [resolvable:$true] %s31
      %37 = dma.hbm_to_vmem [thread:$0]  %s1, 384, %s32, [#allocation6], 128, 128, 8
    $region9: #{tpu_custom_call.1} parent=1 // pred_fallthru
      _
    // Predicated region
    $region10: #{tpu_custom_call.1} parent=1 // pred_check
      _
    $region11: #{tpu_custom_call.1} parent=1 // pred_check_branch
      %39 = sbr.rel (0) target = $region13
    $region12: #{tpu_custom_call.1} parent=1 // pred_region
      _
    $region13: #{tpu_custom_call.1} parent=1 // pred_fallthru
      _
    // Predicated region
    $region14: #{tpu_custom_call.1} parent=1 // pred_check
      _
    $region15: #{tpu_custom_call.1} parent=1 // pred_check_branch
      %41 = sbr.rel (0) target = $region17
    $region16: #{tpu_custom_call.1} parent=1 // pred_region
      %s43 = ssub.s32 2048, 2048
      %44 = vsyncadd [#allocation6], %s43
      %s45 = sshll.u32 [#allocation7], 4
      %s46 = int_to_ptr.vmem [resolvable:$true] %s45
      %51 = dma.hbm_to_vmem [thread:$0]  %s3, 2048, %s46, [#allocation6], 128, 128, 8
    $region17: #{tpu_custom_call.1} parent=1 // pred_fallthru
      _
    // Predicated region
    $region18: #{tpu_custom_call.1} parent=1 // pred_check
      _
    $region19: #{tpu_custom_call.1} parent=1 // pred_check_branch
      %53 = sbr.rel (0) target = $region21
    $region20: #{tpu_custom_call.1} parent=1 // pred_region
      _
    $region21: #{tpu_custom_call.1} parent=1 // pred_fallthru
      _
    // Predicated region
    $region22: #{tpu_custom_call.1} parent=1 // pred_check
      _
    $region23: #{tpu_custom_call.1} parent=1 // pred_check_branch
      %55 = sbr.rel (0) target = $region25
    $region24: #{tpu_custom_call.1} parent=1 // pred_region
      %s57 = ssub.s32 2048, 2048
      %58 = vsyncadd [#allocation9], %s57
      %s59 = sshll.u32 [#allocation8], 4
      %s60 = int_to_ptr.vmem [resolvable:$true] %s59
      %65 = dma.hbm_to_vmem [thread:$0]  %s5, 2048, %s60, [#allocation9], 128, 128, 8
    $region25: #{tpu_custom_call.1} parent=1 // pred_fallthru
      _
    // Predicated region
    $region26: #{tpu_custom_call.1} parent=1 // pred_check
      _
    $region27: #{tpu_custom_call.1} parent=1 // pred_check_branch
      %67 = sbr.rel (0) target = $region29
    $region28: #{tpu_custom_call.1} parent=1 // pred_region
      _
    $region29: #{tpu_custom_call.1} parent=1 // pred_fallthru
      _
    // Predicated region
    $region30: #{tpu_custom_call.1} parent=1 // pred_check
      _
    $region31: #{tpu_custom_call.1} parent=1 // pred_check_branch
      %69 = sbr.rel (0) target = $region33
    $region32: #{tpu_custom_call.1} parent=1 // pred_region
      %70 = dma.done [#allocation3], 128
    $region33: #{tpu_custom_call.1} parent=1 // pred_fallthru
      _
    // Predicated region
    $region34: #{tpu_custom_call.1} parent=1 // pred_check
      _
    $region35: #{tpu_custom_call.1} parent=1 // pred_check_branch
      %72 = sbr.rel (0) target = $region37
    $region36: #{tpu_custom_call.1} parent=1 // pred_region
      %73 = dma.done [#allocation6], 384
    $region37: #{tpu_custom_call.1} parent=1 // pred_fallthru
      _
    // Predicated region
    $region38: #{tpu_custom_call.1} parent=1 // pred_check
      _
    $region39: #{tpu_custom_call.1} parent=1 // pred_check_branch
      %75 = sbr.rel (0) target = $region41
    $region40: #{tpu_custom_call.1} parent=1 // pred_region
      %76 = dma.done [#allocation6], 2048
    $region41: #{tpu_custom_call.1} parent=1 // pred_fallthru
      _
    // Predicated region
    $region42: #{tpu_custom_call.1} parent=1 // pred_check
      _
    $region43: #{tpu_custom_call.1} parent=1 // pred_check_branch
      %78 = sbr.rel (0) target = $region45
    $region44: #{tpu_custom_call.1} parent=1 // pred_region
      %79 = dma.done [#allocation9], 2048
    $region45: #{tpu_custom_call.1} parent=1 // pred_fallthru
      _
    %v80 = vld [vmem:[#allocation2] sm:$0xff]
    %v81 = vld [vmem:[#allocation5] sm:$0xff]
    %v82 = vld [vmem:[#allocation5 + $0x8] sm:$0xff]
    %v83 = vld [vmem:[#allocation5 + $0x10] sm:$0x3]
    %v84 = vld [vmem:[%s2] sm:$0x1]
    %v86 = vlaneseq
    %v87 = vshrl.u32 %v86, 7
    %v88 = vsub.s32 0, %v87
    %v89 = vrot.slane %v84, %v88
    %vm91 = vcmask 146432
    %v93 = vsel %vm91, %v80, 0
    %vm95 = vcmask 1041408
    %v97 = vsel %vm95, %v83, 0
    %99 = vmatprep.subr.mxu0 0.0
    %100 = vmatpush1.msra.mxu0 %v81
    %101 = vmatprep.subr.mxu0 0.0
    %102 = vmatpush1.msra.mxu0 %v82
    %103 = vmatprep.subr.mxu0 0.0
    %104 = vmatpush1.msra.mxu0 %v97
    %105 = vmatprep.subr.mxu0 0.0
    %106 = vmatpush1.msra.mxu0 0.0
    %107 = vmatprep.subr.mxu0 0.0
    %108 = vmatpush1.msra.mxu0 0.0
    %109 = vmatprep.subr.mxu0 0.0
    %110 = vmatpush1.msra.mxu0 0.0
    %111 = vmatprep.subr.mxu0 0.0
    %112 = vmatpush1.msra.mxu0 0.0
    %113 = vmatprep.subr.mxu0 0.0
    %114 = vmatpush1.msra.mxu0 0.0
    %115 = vmatprep.subr.mxu0 0.0
    %116 = vmatpush1.msra.mxu0 0.0
    %117 = vmatprep.subr.mxu0 0.0
    %118 = vmatpush1.msra.mxu0 0.0
    %119 = vmatprep.subr.mxu0 0.0
    %120 = vmatpush1.msra.mxu0 0.0
    %121 = vmatprep.subr.mxu0 0.0
    %122 = vmatpush1.msra.mxu0 0.0
    %123 = vmatprep.subr.mxu0 0.0
    %124 = vmatpush1.msra.mxu0 0.0
    %125 = vmatprep.subr.mxu0 0.0
    %126 = vmatpush1.msra.mxu0 0.0
    %127 = vmatprep.subr.mxu0 0.0
    %128 = vmatpush1.msra.mxu0 0.0
    %129 = vmatprep.subr.mxu0 0.0
    %130 = vmatpush1.msra.mxu0 0.0
    %131 = vmatprep.subr.mxu0 0.0
    %132 = vmatpush1.msra.mxu0 0.0
    %133 = vmatprep.subr.mxu0 0.0
    %134 = vmatpush1.msra.mxu0 0.0
    %135 = vmatprep.subr.mxu0 0.0
    %136 = vmatpush1.msra.mxu0 0.0
    %137 = vmatprep.subr.mxu0 0.0
    %138 = vmatpush1.msra.mxu0 0.0
    %139 = vmatprep.subr.mxu0 0.0
    %140 = vmatpush1.msra.mxu0 0.0
    %141 = vmatprep.subr.mxu0 0.0
    %142 = vmatpush1.msra.mxu0 0.0
    %143 = vmatprep.subr.mxu0 0.0
    %144 = vmatpush1.msra.mxu0 0.0
    %145 = vmatprep.subr.mxu0 0.0
    %146 = vmatpush1.msra.mxu0 0.0
    %147 = vmatprep.subr.mxu0 0.0
    %148 = vmatpush1.msra.mxu0 0.0
    %149 = vmatprep.subr.mxu0 0.0
    %150 = vmatpush1.msra.mxu0 0.0
    %151 = vmatprep.subr.mxu0 0.0
    %152 = vmatpush1.msra.mxu0 0.0
    %153 = vmatprep.subr.mxu0 0.0
    %154 = vmatpush1.msra.mxu0 0.0
    %155 = vmatprep.subr.mxu0 0.0
    %156 = vmatpush1.msra.mxu0 0.0
    %157 = vmatprep.subr.mxu0 0.0
    %158 = vmatpush1.msra.mxu0 0.0
    %159 = vmatprep.subr.mxu0 0.0
    %160 = vmatpush1.msra.mxu0 0.0
    %161 = vmatprep.subr.mxu0 0.0
    %162 = vmatpush1.msra.mxu0 0.0
    %163 = vmatprep.mubr.f32.mxu0 0.0
    %164 = vmatmul.mubr.f32.gmra.mrb[0].mxu0 %v93
    %v165 = vpop.f32.mrb[0].mxu0
    %v166 = vadd.f32 %v89, %v165
    %v167 = vpop.f32.mrb[0].mxu0
    %168 = vdwg.mxu0
    %v169 = vmax.f32 %v166, 0.0
    %v170 = vld [vmem:[#allocation7] sm:$0xff]
    %v171 = vld [vmem:[#allocation7 + $0x8] sm:$0xff]
    %v172 = vld [vmem:[#allocation7 + $0x10] sm:$0xff]
    %v173 = vld [vmem:[#allocation7 + $0x18] sm:$0xff]
    %v174 = vld [vmem:[#allocation7 + $0x20] sm:$0xff]
    %v175 = vld [vmem:[#allocation7 + $0x28] sm:$0xff]
    %v176 = vld [vmem:[#allocation7 + $0x30] sm:$0xff]
    %v177 = vld [vmem:[#allocation7 + $0x38] sm:$0xff]
    %v178 = vld [vmem:[#allocation7 + $0x40] sm:$0xff]
    %v179 = vld [vmem:[#allocation7 + $0x48] sm:$0xff]
    %v180 = vld [vmem:[#allocation7 + $0x50] sm:$0xff]
    %v181 = vld [vmem:[#allocation7 + $0x58] sm:$0xff]
    %v182 = vld [vmem:[#allocation7 + $0x60] sm:$0xff]
    %v183 = vld [vmem:[#allocation7 + $0x68] sm:$0xff]
    %v184 = vld [vmem:[#allocation7 + $0x70] sm:$0xff]
    %v185 = vld [vmem:[#allocation7 + $0x78] sm:$0xff]
    %v186 = vld [vmem:[%s4] sm:$0x1]
    %v188 = vlaneseq
    %v189 = vshrl.u32 %v188, 7
    %v190 = vsub.s32 0, %v189
    %v191 = vrot.slane %v186, %v190
    %193 = vmatprep.subr.mxu0 0.0
    %194 = vmatpush1.msra.mxu0 %v170
    %195 = vmatprep.subr.mxu0 0.0
    %196 = vmatpush1.msra.mxu0 %v171
    %197 = vmatprep.subr.mxu0 0.0
    %198 = vmatpush1.msra.mxu0 %v172
    %199 = vmatprep.subr.mxu0 0.0
    %200 = vmatpush1.msra.mxu0 %v173
    %201 = vmatprep.subr.mxu0 0.0
    %202 = vmatpush1.msra.mxu0 %v174
    %203 = vmatprep.subr.mxu0 0.0
    %204 = vmatpush1.msra.mxu0 %v175
    %205 = vmatprep.subr.mxu0 0.0
    %206 = vmatpush1.msra.mxu0 %v176
    %207 = vmatprep.subr.mxu0 0.0
    %208 = vmatpush1.msra.mxu0 %v177
    %209 = vmatprep.subr.mxu0 0.0
    %210 = vmatpush1.msra.mxu0 %v178
    %211 = vmatprep.subr.mxu0 0.0
    %212 = vmatpush1.msra.mxu0 %v179
    %213 = vmatprep.subr.mxu0 0.0
    %214 = vmatpush1.msra.mxu0 %v180
    %215 = vmatprep.subr.mxu0 0.0
    %216 = vmatpush1.msra.mxu0 %v181
    %217 = vmatprep.subr.mxu0 0.0
    %218 = vmatpush1.msra.mxu0 %v182
    %219 = vmatprep.subr.mxu0 0.0
    %220 = vmatpush1.msra.mxu0 %v183
    %221 = vmatprep.subr.mxu0 0.0
    %222 = vmatpush1.msra.mxu0 %v184
    %223 = vmatprep.subr.mxu0 0.0
    %224 = vmatpush1.msra.mxu0 %v185
    %225 = vmatprep.subr.mxu0 0.0
    %226 = vmatpush1.msra.mxu0 0.0
    %227 = vmatprep.subr.mxu0 0.0
    %228 = vmatpush1.msra.mxu0 0.0
    %229 = vmatprep.subr.mxu0 0.0
    %230 = vmatpush1.msra.mxu0 0.0
    %231 = vmatprep.subr.mxu0 0.0
    %232 = vmatpush1.msra.mxu0 0.0
    %233 = vmatprep.subr.mxu0 0.0
    %234 = vmatpush1.msra.mxu0 0.0
    %235 = vmatprep.subr.mxu0 0.0
    %236 = vmatpush1.msra.mxu0 0.0
    %237 = vmatprep.subr.mxu0 0.0
    %238 = vmatpush1.msra.mxu0 0.0
    %239 = vmatprep.subr.mxu0 0.0
    %240 = vmatpush1.msra.mxu0 0.0
    %241 = vmatprep.subr.mxu0 0.0
    %242 = vmatpush1.msra.mxu0 0.0
    %243 = vmatprep.subr.mxu0 0.0
    %244 = vmatpush1.msra.mxu0 0.0
    %245 = vmatprep.subr.mxu0 0.0
    %246 = vmatpush1.msra.mxu0 0.0
    %247 = vmatprep.subr.mxu0 0.0
    %248 = vmatpush1.msra.mxu0 0.0
    %249 = vmatprep.subr.mxu0 0.0
    %250 = vmatpush1.msra.mxu0 0.0
    %251 = vmatprep.subr.mxu0 0.0
    %252 = vmatpush1.msra.mxu0 0.0
    %253 = vmatprep.subr.mxu0 0.0
    %254 = vmatpush1.msra.mxu0 0.0
    %255 = vmatprep.subr.mxu0 0.0
    %256 = vmatpush1.msra.mxu0 0.0
    %257 = vmatprep.mubr.f32.mxu0 0.0
    %258 = vmatmul.mubr.f32.gmra.mrb[0].mxu0 %v169
    %v259 = vpop.f32.mrb[0].mxu0
    %v260 = vadd.f32 %v191, %v259
    %v261 = vpop.f32.mrb[0].mxu0
    %262 = vdwg.mxu0
    %v263 = vmax.f32 %v260, 0.0
    %v264 = vld [vmem:[#allocation8] sm:$0xff]
    %v265 = vld [vmem:[#allocation8 + $0x8] sm:$0xff]
    %v266 = vld [vmem:[#allocation8 + $0x10] sm:$0xff]
    %v267 = vld [vmem:[#allocation8 + $0x18] sm:$0xff]
    %v268 = vld [vmem:[#allocation8 + $0x20] sm:$0xff]
    %v269 = vld [vmem:[#allocation8 + $0x28] sm:$0xff]
    %v270 = vld [vmem:[#allocation8 + $0x30] sm:$0xff]
    %v271 = vld [vmem:[#allocation8 + $0x38] sm:$0xff]
    %v272 = vld [vmem:[#allocation8 + $0x40] sm:$0xff]
    %v273 = vld [vmem:[#allocation8 + $0x48] sm:$0xff]
    %v274 = vld [vmem:[#allocation8 + $0x50] sm:$0xff]
    %v275 = vld [vmem:[#allocation8 + $0x58] sm:$0xff]
    %v276 = vld [vmem:[#allocation8 + $0x60] sm:$0xff]
    %v277 = vld [vmem:[#allocation8 + $0x68] sm:$0xff]
    %v278 = vld [vmem:[#allocation8 + $0x70] sm:$0xff]
    %v279 = vld [vmem:[#allocation8 + $0x78] sm:$0xff]
    %v280 = vld [vmem:[%s6] sm:$0x1]
    %v282 = vlaneseq
    %v283 = vshrl.u32 %v282, 7
    %v284 = vsub.s32 0, %v283
    %v285 = vrot.slane %v280, %v284
    %287 = vmatprep.subr.mxu0 0.0
    %288 = vmatpush1.msra.mxu0 %v264
    %289 = vmatprep.subr.mxu0 0.0
    %290 = vmatpush1.msra.mxu0 %v265
    %291 = vmatprep.subr.mxu0 0.0
    %292 = vmatpush1.msra.mxu0 %v266
    %293 = vmatprep.subr.mxu0 0.0
    %294 = vmatpush1.msra.mxu0 %v267
    %295 = vmatprep.subr.mxu0 0.0
    %296 = vmatpush1.msra.mxu0 %v268
    %297 = vmatprep.subr.mxu0 0.0
    %298 = vmatpush1.msra.mxu0 %v269
    %299 = vmatprep.subr.mxu0 0.0
    %300 = vmatpush1.msra.mxu0 %v270
    %301 = vmatprep.subr.mxu0 0.0
    %302 = vmatpush1.msra.mxu0 %v271
    %303 = vmatprep.subr.mxu0 0.0
    %304 = vmatpush1.msra.mxu0 %v272
    %305 = vmatprep.subr.mxu0 0.0
    %306 = vmatpush1.msra.mxu0 %v273
    %307 = vmatprep.subr.mxu0 0.0
    %308 = vmatpush1.msra.mxu0 %v274
    %309 = vmatprep.subr.mxu0 0.0
    %310 = vmatpush1.msra.mxu0 %v275
    %311 = vmatprep.subr.mxu0 0.0
    %312 = vmatpush1.msra.mxu0 %v276
    %313 = vmatprep.subr.mxu0 0.0
    %314 = vmatpush1.msra.mxu0 %v277
    %315 = vmatprep.subr.mxu0 0.0
    %316 = vmatpush1.msra.mxu0 %v278
    %317 = vmatprep.subr.mxu0 0.0
    %318 = vmatpush1.msra.mxu0 %v279
    %319 = vmatprep.subr.mxu0 0.0
    %320 = vmatpush1.msra.mxu0 0.0
    %321 = vmatprep.subr.mxu0 0.0
    %322 = vmatpush1.msra.mxu0 0.0
    %323 = vmatprep.subr.mxu0 0.0
    %324 = vmatpush1.msra.mxu0 0.0
    %325 = vmatprep.subr.mxu0 0.0
    %326 = vmatpush1.msra.mxu0 0.0
    %327 = vmatprep.subr.mxu0 0.0
    %328 = vmatpush1.msra.mxu0 0.0
    %329 = vmatprep.subr.mxu0 0.0
    %330 = vmatpush1.msra.mxu0 0.0
    %331 = vmatprep.subr.mxu0 0.0
    %332 = vmatpush1.msra.mxu0 0.0
    %333 = vmatprep.subr.mxu0 0.0
    %334 = vmatpush1.msra.mxu0 0.0
    %335 = vmatprep.subr.mxu0 0.0
    %336 = vmatpush1.msra.mxu0 0.0
    %337 = vmatprep.subr.mxu0 0.0
    %338 = vmatpush1.msra.mxu0 0.0
    %339 = vmatprep.subr.mxu0 0.0
    %340 = vmatpush1.msra.mxu0 0.0
    %341 = vmatprep.subr.mxu0 0.0
    %342 = vmatpush1.msra.mxu0 0.0
    %343 = vmatprep.subr.mxu0 0.0
    %344 = vmatpush1.msra.mxu0 0.0
    %345 = vmatprep.subr.mxu0 0.0
    %346 = vmatpush1.msra.mxu0 0.0
    %347 = vmatprep.subr.mxu0 0.0
    %348 = vmatpush1.msra.mxu0 0.0
    %349 = vmatprep.subr.mxu0 0.0
    %350 = vmatpush1.msra.mxu0 0.0
    %351 = vmatprep.mubr.f32.mxu0 0.0
    %352 = vmatmul.mubr.f32.gmra.mrb[0].mxu0 %v263
    %v353 = vpop.f32.mrb[0].mxu0
    %v354 = vadd.f32 %v285, %v353
    %v355 = vpop.f32.mrb[0].mxu0
    %356 = vdwg.mxu0
    %357 = vst [vmem:[#allocation10] sm:$0xff] %v354
    // Predicated region
    $region46: #{tpu_custom_call.1} parent=1 // pred_check
      _
    $region47: #{tpu_custom_call.1} parent=1 // pred_check_branch
      %359 = sbr.rel (0) target = $region49
    $region48: #{tpu_custom_call.1} parent=1 // pred_region
      %s361 = ssub.s32 128, 128
      %362 = vsyncadd [#allocation4], %s361
      %s364 = sshll.u32 [#allocation10], 4
      %s365 = int_to_ptr.vmem [resolvable:$true] %s364
      %367 = dma.vmem_to_hbm [thread:$0]  %s365, 128, %s7, [#allocation4]
    $region49: #{tpu_custom_call.1} parent=1 // pred_fallthru
      _
    // Predicated region
    $region50: #{tpu_custom_call.1} parent=1 // pred_check
      _
    $region51: #{tpu_custom_call.1} parent=1 // pred_check_branch
      %369 = sbr.rel (0) target = $region53
    $region52: #{tpu_custom_call.1} parent=1 // pred_region
      %370 = dma.done [#allocation4], 128
    $region53: #{tpu_custom_call.1} parent=1 // pred_fallthru
      _
    %371 = vsyncpa [#allocation3], 1
    %372 = vsyncpa [#allocation6], 1
    %373 = vsyncpa [#allocation9], 1
    %374 = vsyncpa [#allocation4], 1

</llo_original>
